<compile_context>
chip_gen: v6e
topology: v6e:2x2x1
jax: 0.10.0
libtpu: 0.0.40
codegen_flags: <defaults>
</compile_context>

<pallas_src>
import jax
import jax.numpy as jnp
from jax.experimental import pallas as pl
from jax.experimental.pallas import tpu as pltpu

HIDDEN = 256        # hidden width of each Q-net (fixed by the PyTorch module)
TILE_B_MAX = 512    # max batch tile; per-tile VMEM use is tiny (< 3 MiB)


# ---------------------------------------------------------------------------
# Fused kernel: both Q-nets for one batch tile.
# ---------------------------------------------------------------------------
def matd3_critic_kernel(x_ref, w1_ref, b1_ref, w2_ref, b2_ref, w3_ref, b3_ref,
                        out_ref):
    """Packed-weight layout (built on the host, see init_params):
         x  : (tile_b, D)  bf16, D = obs_dim + act_dim (host-side concat)
         w1 : (D, 2H)      bf16, cols [:H] = q1's W1, cols [H:] = q2's W1
         b1 : (1, 2H)      f32
         w2 : (H, 2H)      bf16, cols [:H] = q1's W2, cols [H:] = q2's W2
         b2 : (1, 2H)      f32
         w3 : (2H, 2)      bf16, block-diagonal: [:H,0]=q1's W3, [H:,1]=q2's W3
         b3 : (1, 2)       f32
         out: (tile_b, 2)  f32, col 0 = q1, col 1 = q2
    """
    H = HIDDEN
    x = x_ref[...]                                              # bf16 (tile_b, D)

    # Layer 1, both Q-nets at once: one K=D, N=2H bf16 matmul, f32 accumulate.
    h1 = jnp.dot(x, w1_ref[...], preferred_element_type=jnp.float32)
    h1 = jnp.maximum(h1 + b1_ref[...], 0.0)                     # f32 (tile_b, 2H)
    h1 = h1.astype(jnp.bfloat16)

    # Layer 2: independent 256x256 weights per net -> two bf16 matmuls.
    h2a = jnp.dot(h1[:, :H], w2_ref[:, :H], preferred_element_type=jnp.float32)
    h2a = jnp.maximum(h2a + b2_ref[:, :H], 0.0).astype(jnp.bfloat16)
    h2b = jnp.dot(h1[:, H:], w2_ref[:, H:], preferred_element_type=jnp.float32)
    h2b = jnp.maximum(h2b + b2_ref[:, H:], 0.0).astype(jnp.bfloat16)

    # Layer 3: one K=2H, N=2 dot against the block-diagonal W3.
    # The concat is lane-aligned (each half is 256 = 2*128 lanes) -> vreg copies.
    h2 = jnp.concatenate([h2a, h2b], axis=-1)                   # bf16 (tile_b, 2H)
    q = jnp.dot(h2, w3_ref[...], preferred_element_type=jnp.float32) + b3_ref[...]
    out_ref[...] = q                                            # f32 (tile_b, 2)


# ---------------------------------------------------------------------------
# Host wrapper: adaptive batch tile, weights VMEM-resident via constant maps.
# ---------------------------------------------------------------------------
def _round_up(x, m):
    return ((x + m - 1) // m) * m


def matd3_critic_forward(obs, act, params, *, tile_b_max=TILE_B_MAX):
    B = obs.shape[0]
    # Single host-side concat + bf16 cast (fused by XLA; halves input DMA bytes).
    x = jnp.concatenate([obs, act], axis=-1).astype(jnp.bfloat16)
    D = x.shape[1]

    # Adaptive tile: never bigger than needed for small B, and when B is large
    # cap at tile_b_max but keep the grid >= 2 steps so v7x megacore shards it.
    tile_b = int(min(tile_b_max, max(16, _round_up(pl.cdiv(B, 2), 16))))
    grid = pl.cdiv(B, tile_b)            # ragged last block handled by Pallas

    def const_spec(arr):                 # full weight block, stays VMEM-resident
        return pl.BlockSpec(arr.shape, lambda i: (0, 0))

    args = (x,
            params['w1'], params['b1'],
            params['w2'], params['b2'],
            params['w3'], params['b3'])
    in_specs = [pl.BlockSpec((tile_b, D), lambda i: (i, 0))] \
        + [const_spec(a) for a in args[1:]]

    out = pl.pallas_call(
        matd3_critic_kernel,
        out_shape=jax.ShapeDtypeStruct((B, 2), jnp.float32),
        grid=(grid,),
        in_specs=in_specs,
        out_specs=pl.BlockSpec((tile_b, 2), lambda i: (i, 0)),
        compiler_params=pltpu.CompilerParams(
            dimension_semantics=("parallel",)),
        # Note: per-tile VMEM at tile_b=512 is ~3 MiB, well under even v5e's
        # 16 MiB scoped default, so no vmem_limit_bytes override is needed.
    )(*args)

    return out[:, 0:1], out[:, 1:2]      # (q1, q2), each (B, 1) like PyTorch


# ---------------------------------------------------------------------------
# Parameters (deterministic; packed layout described in the kernel docstring)
# ---------------------------------------------------------------------------
def init_params(key, obs_dim, act_dim, hidden=HIDDEN):
    D = obs_dim + act_dim
    ks = jax.random.split(key, 9)

    def w(k, fi, fo):
        return jax.random.normal(k, (fi, fo), jnp.float32) / jnp.sqrt(float(fi))

    w1 = jnp.concatenate([w(ks[0], D, hidden), w(ks[1], D, hidden)], axis=1)
    w2 = jnp.concatenate([w(ks[2], hidden, hidden), w(ks[3], hidden, hidden)],
                         axis=1)
    w3_q1 = w(ks[4], hidden, 1)
    w3_q2 = w(ks[5], hidden, 1)
    z = jnp.zeros((hidden, 1), jnp.float32)
    w3_bd = jnp.concatenate([jnp.concatenate([w3_q1, z], axis=1),     # (H, 2)
                             jnp.concatenate([z, w3_q2], axis=1)],    # (H, 2)
                            axis=0)                                   # (2H, 2)
    return {
        'w1': w1.astype(jnp.bfloat16),                          # (D, 2H)
        'b1': 0.01 * jax.random.normal(ks[6], (1, 2 * hidden), jnp.float32),
        'w2': w2.astype(jnp.bfloat16),                          # (H, 2H)
        'b2': 0.01 * jax.random.normal(ks[7], (1, 2 * hidden), jnp.float32),
        'w3': w3_bd.astype(jnp.bfloat16),                       # (2H, 2) block-diag
        'b3': 0.01 * jax.random.normal(ks[8], (1, 2), jnp.float32),
    }


# Pure-JAX reference (mirrors the PyTorch forward) for a correctness check.
def reference_forward(obs, act, p, hidden=HIDDEN):
    x = jnp.concatenate([obs, act], axis=-1)
    hp = jax.lax.Precision.HIGHEST
    w1 = p['w1'].astype(jnp.float32)
    w2 = p['w2'].astype(jnp.float32)
    w3 = p['w3'].astype(jnp.float32)
    h1 = jnp.maximum(jnp.dot(x, w1, precision=hp) + p['b1'], 0.0)
    h2a = jnp.maximum(jnp.dot(h1[:, :hidden], w2[:, :hidden], precision=hp)
                      + p['b2'][:, :hidden], 0.0)
    h2b = jnp.maximum(jnp.dot(h1[:, hidden:], w2[:, hidden:], precision=hp)
                      + p['b2'][:, hidden:], 0.0)
    q1 = jnp.dot(h2a, w3[:hidden, 0:1], precision=hp) + p['b3'][:, 0:1]
    q2 = jnp.dot(h2b, w3[hidden:, 1:2], precision=hp) + p['b3'][:, 1:2]
    return q1, q2


if __name__ == "__main__":
    key = jax.random.PRNGKey(0)
    pkey, okey, akey = jax.random.split(key, 3)

    B, OBS_DIM, ACT_DIM = 4, 24, 8
    params = init_params(pkey, OBS_DIM, ACT_DIM)
    obs = jax.random.normal(okey, (B, OBS_DIM), jnp.float32)
    act = jax.random.normal(akey, (B, ACT_DIM), jnp.float32)

    q1, q2 = matd3_critic_forward(obs, act, params)
    q1, q2 = jax.block_until_ready((q1, q2))

    assert q1.shape == (B, 1) and q2.shape == (B, 1)
    assert bool(jnp.all(jnp.isfinite(q1))) and bool(jnp.all(jnp.isfinite(q2)))

    # bf16 MXU inputs (f32 accumulation) vs. f32 HIGHEST-precision reference.
    r1, r2 = reference_forward(obs, act, params)
    err = max(float(jnp.max(jnp.abs(q1 - r1))), float(jnp.max(jnp.abs(q2 - r2))))
    assert err < 2.5e-2, f"mismatch vs reference: {err}"

    print("KERNEL_OK")
</pallas_src>

<mosaic_0001>
module attributes {stable_mosaic.version = 11 : i64} {
  func.func @matd3_critic_kernel(%arg0: i32, %arg1: memref<16x32xbf16, #tpu.memory_space<vmem>>, %arg2: memref<32x512xbf16, #tpu.memory_space<vmem>>, %arg3: memref<1x512xf32, #tpu.memory_space<vmem>>, %arg4: memref<256x512xbf16, #tpu.memory_space<vmem>>, %arg5: memref<1x512xf32, #tpu.memory_space<vmem>>, %arg6: memref<512x2xbf16, #tpu.memory_space<vmem>>, %arg7: memref<1x2xf32, #tpu.memory_space<vmem>>, %arg8: memref<16x2xf32, #tpu.memory_space<vmem>>) attributes {dimension_semantics = [#tpu.dimension_semantics<parallel>], iteration_bounds = array<i64: 1>, scalar_prefetch = 0 : i64, scratch_operands = 0 : i64, tpu.core_type = #tpu.core_type<tc>, window_params = [{transform_indices = @transform_0, window_bounds = array<i64: 16, 32>}, {pipeline_mode = #tpu.pipeline_mode<synchronous>, transform_indices = @transform_1, window_bounds = array<i64: 32, 512>}, {pipeline_mode = #tpu.pipeline_mode<synchronous>, transform_indices = @transform_2, window_bounds = array<i64: 1, 512>}, {pipeline_mode = #tpu.pipeline_mode<synchronous>, transform_indices = @transform_3, window_bounds = array<i64: 256, 512>}, {pipeline_mode = #tpu.pipeline_mode<synchronous>, transform_indices = @transform_4, window_bounds = array<i64: 1, 512>}, {pipeline_mode = #tpu.pipeline_mode<synchronous>, transform_indices = @transform_5, window_bounds = array<i64: 512, 2>}, {pipeline_mode = #tpu.pipeline_mode<synchronous>, transform_indices = @transform_6, window_bounds = array<i64: 1, 2>}, {transform_indices = @transform_7, window_bounds = array<i64: 16, 2>}]} {
    %c0 = arith.constant 0 : index
    %c0_0 = arith.constant 0 : index
    %0 = vector.load %arg1[%c0, %c0_0] : memref<16x32xbf16, #tpu.memory_space<vmem>>, vector<16x32xbf16>
    %c0_1 = arith.constant 0 : index
    %c0_2 = arith.constant 0 : index
    %1 = vector.load %arg2[%c0_1, %c0_2] : memref<32x512xbf16, #tpu.memory_space<vmem>>, vector<32x512xbf16>
    %cst = arith.constant dense<0.000000e+00> : vector<16x512xf32>
    %2 = tpu.matmul %0, %1, %cst {dimension_numbers = #tpu.dot_dimension_numbers<[1], [0], [0], [1], [0, 0, 1, 1], [], []>} : vector<16x32xbf16>, vector<32x512xbf16>, vector<16x512xf32> -> vector<16x512xf32>
    %c0_3 = arith.constant 0 : index
    %c0_4 = arith.constant 0 : index
    %3 = vector.load %arg3[%c0_3, %c0_4] : memref<1x512xf32, #tpu.memory_space<vmem>>, vector<1x512xf32>
    %4 = vector.broadcast %3 : vector<1x512xf32> to vector<16x512xf32>
    %5 = arith.addf %2, %4 : vector<16x512xf32>
    %cst_5 = arith.constant 0.000000e+00 : f32
    %6 = vector.broadcast %cst_5 : f32 to vector<16x512xf32>
    %7 = arith.maximumf %5, %6 : vector<16x512xf32>
    %8 = arith.truncf %7 : vector<16x512xf32> to vector<16x512xbf16>
    %9 = vector.extract_strided_slice %8 {offsets = [0, 0], sizes = [16, 256], strides = [1, 1]} : vector<16x512xbf16> to vector<16x256xbf16>
    %c0_6 = arith.constant 0 : index
    %c0_7 = arith.constant 0 : index
    %10 = vector.load %arg4[%c0_6, %c0_7] : memref<256x512xbf16, #tpu.memory_space<vmem>>, vector<256x256xbf16>
    %cst_8 = arith.constant dense<0.000000e+00> : vector<16x256xf32>
    %11 = tpu.matmul %9, %10, %cst_8 {dimension_numbers = #tpu.dot_dimension_numbers<[1], [0], [0], [1], [0, 0, 1, 1], [], []>} : vector<16x256xbf16>, vector<256x256xbf16>, vector<16x256xf32> -> vector<16x256xf32>
    %c0_9 = arith.constant 0 : index
    %c0_10 = arith.constant 0 : index
    %12 = vector.load %arg5[%c0_9, %c0_10] : memref<1x512xf32, #tpu.memory_space<vmem>>, vector<1x256xf32>
    %13 = vector.broadcast %12 : vector<1x256xf32> to vector<16x256xf32>
    %14 = arith.addf %11, %13 : vector<16x256xf32>
    %cst_11 = arith.constant 0.000000e+00 : f32
    %15 = vector.broadcast %cst_11 : f32 to vector<16x256xf32>
    %16 = arith.maximumf %14, %15 : vector<16x256xf32>
    %17 = arith.truncf %16 : vector<16x256xf32> to vector<16x256xbf16>
    %18 = vector.extract_strided_slice %8 {offsets = [0, 256], sizes = [16, 256], strides = [1, 1]} : vector<16x512xbf16> to vector<16x256xbf16>
    %c0_12 = arith.constant 0 : index
    %c256 = arith.constant 256 : index
    %19 = vector.load %arg4[%c0_12, %c256] : memref<256x512xbf16, #tpu.memory_space<vmem>>, vector<256x256xbf16>
    %cst_13 = arith.constant dense<0.000000e+00> : vector<16x256xf32>
    %20 = tpu.matmul %18, %19, %cst_13 {dimension_numbers = #tpu.dot_dimension_numbers<[1], [0], [0], [1], [0, 0, 1, 1], [], []>} : vector<16x256xbf16>, vector<256x256xbf16>, vector<16x256xf32> -> vector<16x256xf32>
    %c0_14 = arith.constant 0 : index
    %c256_15 = arith.constant 256 : index
    %21 = vector.load %arg5[%c0_14, %c256_15] : memref<1x512xf32, #tpu.memory_space<vmem>>, vector<1x256xf32>
    %22 = vector.broadcast %21 : vector<1x256xf32> to vector<16x256xf32>
    %23 = arith.addf %20, %22 : vector<16x256xf32>
    %cst_16 = arith.constant 0.000000e+00 : f32
    %24 = vector.broadcast %cst_16 : f32 to vector<16x256xf32>
    %25 = arith.maximumf %23, %24 : vector<16x256xf32>
    %26 = arith.truncf %25 : vector<16x256xf32> to vector<16x256xbf16>
    %27 = tpu.concatenate %17, %26 in 1 : vector<16x256xbf16>, vector<16x256xbf16> -> vector<16x512xbf16>
    %c0_17 = arith.constant 0 : index
    %c0_18 = arith.constant 0 : index
    %28 = vector.load %arg6[%c0_17, %c0_18] : memref<512x2xbf16, #tpu.memory_space<vmem>>, vector<512x2xbf16>
    %cst_19 = arith.constant dense<0.000000e+00> : vector<16x2xf32>
    %29 = tpu.matmul %27, %28, %cst_19 {dimension_numbers = #tpu.dot_dimension_numbers<[1], [0], [0], [1], [0, 0, 1, 1], [], []>} : vector<16x512xbf16>, vector<512x2xbf16>, vector<16x2xf32> -> vector<16x2xf32>
    %c0_20 = arith.constant 0 : index
    %c0_21 = arith.constant 0 : index
    %30 = vector.load %arg7[%c0_20, %c0_21] : memref<1x2xf32, #tpu.memory_space<vmem>>, vector<1x2xf32>
    %31 = vector.broadcast %30 : vector<1x2xf32> to vector<16x2xf32>
    %32 = arith.addf %29, %31 : vector<16x2xf32>
    %c0_22 = arith.constant 0 : index
    %c0_23 = arith.constant 0 : index
    %33 = vector.load %arg8[%c0_22, %c0_23] : memref<16x2xf32, #tpu.memory_space<vmem>>, vector<16x2xf32>
    tpu.vector_store %arg8[%c0_22, %c0_23], %32 {strides = array<i32>} : memref<16x2xf32, #tpu.memory_space<vmem>>, vector<16x2xf32>,
    return
  }
  func.func @transform_0(%arg0: i32) -> (i32, i32) {
    %c0_i32 = arith.constant 0 : i32
    %c0_i32_0 = arith.constant 0 : i32
    return %arg0, %c0_i32 : i32, i32
  }
  func.func @transform_1(%arg0: i32) -> (i32, i32) {
    %c0_i32 = arith.constant 0 : i32
    %c0_i32_0 = arith.constant 0 : i32
    %c0_i32_1 = arith.constant 0 : i32
    return %c0_i32, %c0_i32_0 : i32, i32
  }
  func.func @transform_2(%arg0: i32) -> (i32, i32) {
    %c0_i32 = arith.constant 0 : i32
    %c0_i32_0 = arith.constant 0 : i32
    %c0_i32_1 = arith.constant 0 : i32
    return %c0_i32, %c0_i32_0 : i32, i32
  }
  func.func @transform_3(%arg0: i32) -> (i32, i32) {
    %c0_i32 = arith.constant 0 : i32
    %c0_i32_0 = arith.constant 0 : i32
    %c0_i32_1 = arith.constant 0 : i32
    return %c0_i32, %c0_i32_0 : i32, i32
  }
  func.func @transform_4(%arg0: i32) -> (i32, i32) {
    %c0_i32 = arith.constant 0 : i32
    %c0_i32_0 = arith.constant 0 : i32
    %c0_i32_1 = arith.constant 0 : i32
    return %c0_i32, %c0_i32_0 : i32, i32
  }
  func.func @transform_5(%arg0: i32) -> (i32, i32) {
    %c0_i32 = arith.constant 0 : i32
    %c0_i32_0 = arith.constant 0 : i32
    %c0_i32_1 = arith.constant 0 : i32
    return %c0_i32, %c0_i32_0 : i32, i32
  }
  func.func @transform_6(%arg0: i32) -> (i32, i32) {
    %c0_i32 = arith.constant 0 : i32
    %c0_i32_0 = arith.constant 0 : i32
    %c0_i32_1 = arith.constant 0 : i32
    return %c0_i32, %c0_i32_0 : i32, i32
  }
  func.func @transform_7(%arg0: i32) -> (i32, i32) {
    %c0_i32 = arith.constant 0 : i32
    %c0_i32_0 = arith.constant 0 : i32
    return %arg0, %c0_i32 : i32, i32
  }
}

</mosaic_0001>

<llo_original>
// kernel: tpu_custom_call.1
$region0: #{tpu_custom_call.1}
  #allocation0 [shape = 'u32[]', space=smem, size = 0x4, offset = 0x4, fixed_abs, tag = 'smem constant byte address 0x4 - core index']
  #allocation1 [shape = 'u32[144,128]{1,0:T(1,128)}', space=vmem, size = 0x12000, scoped, tag = 'internal scratch']
  %s0 = inlined_call_operand.vmem [shape: bf16[4,32], index: 0, kind: input, shape index: {}]
  %s1 = inlined_call_operand.vmem [shape: bf16[32,512], index: 1, kind: input, shape index: {}]
  %s2 = inlined_call_operand.vmem [shape: f32[1,512], index: 2, kind: input, shape index: {}]
  %s3 = inlined_call_operand.hbm [shape: bf16[256,512], index: 3, kind: input, shape index: {}]
  %s4 = inlined_call_operand.vmem [shape: f32[1,512], index: 4, kind: input, shape index: {}]
  %s5 = inlined_call_operand.vmem [shape: bf16[512,2], index: 5, kind: input, shape index: {}]
  %s6 = inlined_call_operand.vmem [shape: f32[1,2], index: 6, kind: input, shape index: {}]
  %s7 = inlined_call_operand.vmem [shape: f32[4,2], index: 7, kind: output, shape index: {}]
  %s8 = sld [smem:[#allocation0]]
  $region72: #{tpu_custom_call.1} parent=0
    _
  %s10 = ssub.s32 1, %s8
  %s11 = scalar_select 0, %s10, %s8
  $region1: #{tpu_custom_call.1} parent=0
    #allocation2 [shape = 'u8[262144]{0}', space=vmem, size = 0x40000, scoped, tag = 'input window, operand 3, single buffered']
    #allocation3 [shape = 's32[1]{0}', space=sflag, size = 0x4, scoped, tag = 'scoped memory for tpu_custom_call.1']
    #allocation4 [shape = 'u8[8192]{0}', space=vmem, size = 0x2000, scoped, tag = 'output window, operand 0, single buffered']
    %12 = vsyncpa [#allocation3], 0
    // Predicated region
    $region2: #{tpu_custom_call.1} parent=1 // pred_check
      _
    $region3: #{tpu_custom_call.1} parent=1 // pred_check_branch
      %14 = sbr.rel (0) target = $region5
    $region4: #{tpu_custom_call.1} parent=1 // pred_region
      _
    $region5: #{tpu_custom_call.1} parent=1 // pred_fallthru
      _
    // Predicated region
    $region6: #{tpu_custom_call.1} parent=1 // pred_check
      _
    $region7: #{tpu_custom_call.1} parent=1 // pred_check_branch
      %16 = sbr.rel (0) target = $region9
    $region8: #{tpu_custom_call.1} parent=1 // pred_region
      _
    $region9: #{tpu_custom_call.1} parent=1 // pred_fallthru
      _
    // Predicated region
    $region10: #{tpu_custom_call.1} parent=1 // pred_check
      _
    $region11: #{tpu_custom_call.1} parent=1 // pred_check_branch
      %18 = sbr.rel (0) target = $region13
    $region12: #{tpu_custom_call.1} parent=1 // pred_region
      _
    $region13: #{tpu_custom_call.1} parent=1 // pred_fallthru
      _
    // Predicated region
    $region14: #{tpu_custom_call.1} parent=1 // pred_check
      _
    $region15: #{tpu_custom_call.1} parent=1 // pred_check_branch
      %20 = sbr.rel (0) target = $region17
    $region16: #{tpu_custom_call.1} parent=1 // pred_region
      %s22 = ssub.s32 8192, 8192
      %23 = vsyncadd [#allocation3], %s22
      %s24 = sshll.u32 [#allocation2], 4
      %s25 = int_to_ptr.vmem [resolvable:$true] %s24
      %30 = dma.hbm_to_vmem [thread:$0]  %s3, 8192, %s25, [#allocation3], 256, 256, 16
    $region17: #{tpu_custom_call.1} parent=1 // pred_fallthru
      _
    // Predicated region
    $region18: #{tpu_custom_call.1} parent=1 // pred_check
      _
    $region19: #{tpu_custom_call.1} parent=1 // pred_check_branch
      %32 = sbr.rel (0) target = $region21
    $region20: #{tpu_custom_call.1} parent=1 // pred_region
      _
    $region21: #{tpu_custom_call.1} parent=1 // pred_fallthru
      _
    // Predicated region
    $region22: #{tpu_custom_call.1} parent=1 // pred_check
      _
    $region23: #{tpu_custom_call.1} parent=1 // pred_check_branch
      %34 = sbr.rel (0) target = $region25
    $region24: #{tpu_custom_call.1} parent=1 // pred_region
      _
    $region25: #{tpu_custom_call.1} parent=1 // pred_fallthru
      _
    // Predicated region
    $region26: #{tpu_custom_call.1} parent=1 // pred_check
      _
    $region27: #{tpu_custom_call.1} parent=1 // pred_check_branch
      %36 = sbr.rel (0) target = $region29
    $region28: #{tpu_custom_call.1} parent=1 // pred_region
      _
    $region29: #{tpu_custom_call.1} parent=1 // pred_fallthru
      _
    // Predicated region
    $region30: #{tpu_custom_call.1} parent=1 // pred_check
      _
    $region31: #{tpu_custom_call.1} parent=1 // pred_check_branch
      %38 = sbr.rel (0) target = $region33
    $region32: #{tpu_custom_call.1} parent=1 // pred_region
      %39 = dma.done [#allocation3], 8192
    $region33: #{tpu_custom_call.1} parent=1 // pred_fallthru
      _
    %v41 = vld [vmem:[%s0] sm:$0x3]
    %v42 = vld [vmem:[%s0 + $0x2] sm:$0x3]
    %v43 = vld [vmem:[%s0 + $0x4] sm:$0x3]
    %v44 = vld [vmem:[%s0 + $0x6] sm:$0x3]
    %v45 = vld [vmem:[%s1] sm:$0xff]
    %v46 = vld [vmem:[%s1 + $0x8] sm:$0xff]
    %v47 = vld [vmem:[%s1 + $0x10] sm:$0xff]
    %v48 = vld [vmem:[%s1 + $0x18] sm:$0xff]
    %v49 = vld [vmem:[%s1 + $0x20] sm:$0xff]
    %v50 = vld [vmem:[%s1 + $0x28] sm:$0xff]
    %v51 = vld [vmem:[%s1 + $0x30] sm:$0xff]
    %v52 = vld [vmem:[%s1 + $0x38] sm:$0xff]
    %v53 = vld [vmem:[%s2] sm:$0xf]
    %v55 = vlaneseq
    %v56 = vshrl.u32 %v55, 7
    %v57 = vsub.s32 0, %v56
    %v58 = vrot.slane %v53, %v57
    %v59 = vlaneseq
    %v60 = vshrl.u32 %v59, 7
    %v61 = vsub.s32 1, %v60
    %v62 = vrot.slane %v53, %v61
    %v63 = vlaneseq
    %v64 = vshrl.u32 %v63, 7
    %v65 = vsub.s32 2, %v64
    %v66 = vrot.slane %v53, %v65
    %v67 = vlaneseq
    %v68 = vshrl.u32 %v67, 7
    %v69 = vsub.s32 3, %v68
    %v70 = vrot.slane %v53, %v69
    %v79 = vcombine.low %v41, %v42
    %v80 = vcombine.low %v43, %v44
    %v82 = vunpack.c.l.s4 1983009808
    %v83 = vunpack.c.0.s8 %v82
    %v84 = vlaneseq
    %v85 = vshrl.u32 %v84, 7
    %v86 = vsub.s32 %v83, %v85
    %v87 = vrot.slane %v79, %v86
    %v89 = vunpack.c.l.s4 1983009808
    %v90 = vunpack.c.0.s8 %v89
    %v91 = vlaneseq
    %v92 = vshrl.u32 %v91, 7
    %v93 = vsub.s32 %v90, %v92
    %v94 = vrot.slane %v80, %v93
    %v95 = vcombine.low %v87, %v94
    %v104 = vunpack.c.l.b16 %v45
    %v105 = vunpack.c.h.b16 %v45
    %v106 = vunpack.c.l.b16 %v46
    %v107 = vunpack.c.h.b16 %v46
    %v108 = vunpack.c.l.b16 %v47
    %v109 = vunpack.c.h.b16 %v47
    %v110 = vunpack.c.l.b16 %v48
    %v111 = vunpack.c.h.b16 %v48
    %v112 = vunpack.c.l.b16 %v49
    %v113 = vunpack.c.h.b16 %v49
    %v114 = vunpack.c.l.b16 %v50
    %v115 = vunpack.c.h.b16 %v50
    %v116 = vunpack.c.l.b16 %v51
    %v117 = vunpack.c.h.b16 %v51
    %v118 = vunpack.c.l.b16 %v52
    %v119 = vunpack.c.h.b16 %v52
    %v120 = vpack.c.b16 %v108, %v104
    %v121 = vpack.c.b16 %v109, %v105
    %v122 = vpack.c.b16 %v110, %v106
    %v123 = vpack.c.b16 %v111, %v107
    %v124 = vpack.c.b16 %v116, %v112
    %v125 = vpack.c.b16 %v117, %v113
    %v126 = vpack.c.b16 %v118, %v114
    %v127 = vpack.c.b16 %v119, %v115
    %vm136 = vcmask 261120
    %v138 = vsel %vm136, %v95, 0
    %140 = vmatprep.subr.bf16.mxu0 0
    %141 = vmatpush1.bf16.msra.mxu0 0
    %142 = vmatprep.subr.bf16.mxu0 0
    %143 = vmatpush1.bf16.msra.mxu0 0
    %144 = vmatprep.subr.bf16.mxu0 0
    %145 = vmatpush1.bf16.msra.mxu0 0
    %146 = vmatprep.subr.bf16.mxu0 0
    %147 = vmatpush1.bf16.msra.mxu0 0
    %148 = vmatprep.subr.bf16.mxu0 0
    %149 = vmatpush1.bf16.msra.mxu0 0
    %150 = vmatprep.subr.bf16.mxu0 0
    %151 = vmatpush1.bf16.msra.mxu0 0
    %152 = vmatprep.subr.bf16.mxu0 %v125
    %153 = vmatpush1.bf16.msra.mxu0 %v124
    %154 = vmatprep.subr.bf16.mxu0 %v121
    %155 = vmatpush1.bf16.msra.mxu0 %v120
    %156 = vmatprep.subr.bf16.mxu0 0
    %157 = vmatpush2.bf16.msra.mxu0 0
    %158 = vmatprep.subr.bf16.mxu0 0
    %159 = vmatpush2.bf16.msra.mxu0 0
    %160 = vmatprep.subr.bf16.mxu0 0
    %161 = vmatpush2.bf16.msra.mxu0 0
    %162 = vmatprep.subr.bf16.mxu0 0
    %163 = vmatpush2.bf16.msra.mxu0 0
    %164 = vmatprep.subr.bf16.mxu0 0
    %165 = vmatpush2.bf16.msra.mxu0 0
    %166 = vmatprep.subr.bf16.mxu0 0
    %167 = vmatpush2.bf16.msra.mxu0 0
    %168 = vmatprep.subr.bf16.mxu0 0
    %169 = vmatpush2.bf16.msra.mxu0 0
    %170 = vmatprep.subr.bf16.mxu0 0
    %171 = vmatpush2.bf16.msra.mxu0 0
    %172 = vmatprep.mubr.bf16.mxu0 0
    %173 = vmatmul.mubr.bf16.gmra.mxu0 %v138
    %v174 = vpop.f32.mrf.mxu0
    %v175 = vadd.f32 %v58, %v174
    %v176 = vpop.f32.mrf.mxu0
    %v177 = vadd.f32 %v62, %v176
    %v178 = vpop.f32.mrf.mxu0
    %v179 = vadd.f32 %v58, %v178
    %v180 = vpop.f32.mrf.mxu0
    %v181 = vadd.f32 %v62, %v180
    %182 = vdwg.mxu0
    %183 = vmatprep.subr.bf16.mxu0 0
    %184 = vmatpush1.bf16.msra.mxu0 0
    %185 = vmatprep.subr.bf16.mxu0 0
    %186 = vmatpush1.bf16.msra.mxu0 0
    %187 = vmatprep.subr.bf16.mxu0 0
    %188 = vmatpush1.bf16.msra.mxu0 0
    %189 = vmatprep.subr.bf16.mxu0 0
    %190 = vmatpush1.bf16.msra.mxu0 0
    %191 = vmatprep.subr.bf16.mxu0 0
    %192 = vmatpush1.bf16.msra.mxu0 0
    %193 = vmatprep.subr.bf16.mxu0 0
    %194 = vmatpush1.bf16.msra.mxu0 0
    %195 = vmatprep.subr.bf16.mxu0 %v127
    %196 = vmatpush1.bf16.msra.mxu0 %v126
    %197 = vmatprep.subr.bf16.mxu0 %v123
    %198 = vmatpush1.bf16.msra.mxu0 %v122
    %199 = vmatprep.subr.bf16.mxu0 0
    %200 = vmatpush2.bf16.msra.mxu0 0
    %201 = vmatprep.subr.bf16.mxu0 0
    %202 = vmatpush2.bf16.msra.mxu0 0
    %203 = vmatprep.subr.bf16.mxu0 0
    %204 = vmatpush2.bf16.msra.mxu0 0
    %205 = vmatprep.subr.bf16.mxu0 0
    %206 = vmatpush2.bf16.msra.mxu0 0
    %207 = vmatprep.subr.bf16.mxu0 0
    %208 = vmatpush2.bf16.msra.mxu0 0
    %209 = vmatprep.subr.bf16.mxu0 0
    %210 = vmatpush2.bf16.msra.mxu0 0
    %211 = vmatprep.subr.bf16.mxu0 0
    %212 = vmatpush2.bf16.msra.mxu0 0
    %213 = vmatprep.subr.bf16.mxu0 0
    %214 = vmatpush2.bf16.msra.mxu0 0
    %215 = vmatprep.mubr.bf16.mxu0 0
    %216 = vmatmul.mubr.bf16.gmra.mxu0 %v138
    %v217 = vpop.f32.mrf.mxu0
    %v218 = vadd.f32 %v66, %v217
    %v219 = vpop.f32.mrf.mxu0
    %v220 = vadd.f32 %v70, %v219
    %v221 = vpop.f32.mrf.mxu0
    %v222 = vadd.f32 %v66, %v221
    %v223 = vpop.f32.mrf.mxu0
    %v224 = vadd.f32 %v70, %v223
    %225 = vdwg.mxu0
    %v226 = vmax.f32 %v175, 0.0
    %v227 = vmax.f32 %v177, 0.0
    %v228 = vmax.f32 %v218, 0.0
    %v229 = vmax.f32 %v220, 0.0
    %v230 = vmax.f32 %v179, 0.0
    %v231 = vmax.f32 %v181, 0.0
    %v232 = vmax.f32 %v222, 0.0
    %v233 = vmax.f32 %v224, 0.0
    %v234 = vpack.c.bf16 %v230, %v226
    %v235 = vpack.c.bf16 %v231, %v227
    %v236 = vpack.c.bf16 %v232, %v228
    %v237 = vpack.c.bf16 %v233, %v229
    %v238 = vld [vmem:[#allocation2] sm:$0xff]
    %v239 = vld [vmem:[#allocation2 + $0x10] sm:$0xff]
    %v240 = vld [vmem:[#allocation2 + $0x20] sm:$0xff]
    %v241 = vld [vmem:[#allocation2 + $0x30] sm:$0xff]
    %v242 = vld [vmem:[#allocation2 + $0x40] sm:$0xff]
    %v243 = vld [vmem:[#allocation2 + $0x50] sm:$0xff]
    %v244 = vld [vmem:[#allocation2 + $0x60] sm:$0xff]
    %v245 = vld [vmem:[#allocation2 + $0x70] sm:$0xff]
    %v246 = vld [vmem:[#allocation2 + $0x80] sm:$0xff]
    %v247 = vld [vmem:[#allocation2 + $0x90] sm:$0xff]
    %v248 = vld [vmem:[#allocation2 + $0xa0] sm:$0xff]
    %v249 = vld [vmem:[#allocation2 + $0xb0] sm:$0xff]
    %v250 = vld [vmem:[#allocation2 + $0xc0] sm:$0xff]
    %v251 = vld [vmem:[#allocation2 + $0xd0] sm:$0xff]
    %v252 = vld [vmem:[#allocation2 + $0xe0] sm:$0xff]
    %v253 = vld [vmem:[#allocation2 + $0xf0] sm:$0xff]
    %v254 = vld [vmem:[#allocation2 + $0x100] sm:$0xff]
    %v255 = vld [vmem:[#allocation2 + $0x110] sm:$0xff]
    %v256 = vld [vmem:[#allocation2 + $0x120] sm:$0xff]
    %v257 = vld [vmem:[#allocation2 + $0x130] sm:$0xff]
    %v258 = vld [vmem:[#allocation2 + $0x140] sm:$0xff]
    %v259 = vld [vmem:[#allocation2 + $0x150] sm:$0xff]
    %v260 = vld [vmem:[#allocation2 + $0x160] sm:$0xff]
    %v261 = vld [vmem:[#allocation2 + $0x170] sm:$0xff]
    %v262 = vld [vmem:[#allocation2 + $0x180] sm:$0xff]
    %v263 = vld [vmem:[#allocation2 + $0x190] sm:$0xff]
    %v264 = vld [vmem:[#allocation2 + $0x1a0] sm:$0xff]
    %v265 = vld [vmem:[#allocation2 + $0x1b0] sm:$0xff]
    %v266 = vld [vmem:[#allocation2 + $0x1c0] sm:$0xff]
    %v267 = vld [vmem:[#allocation2 + $0x1d0] sm:$0xff]
    %v268 = vld [vmem:[#allocation2 + $0x1e0] sm:$0xff]
    %v269 = vld [vmem:[#allocation2 + $0x1f0] sm:$0xff]
    %v270 = vld [vmem:[%s4] sm:$0x3]
    %v272 = vlaneseq
    %v273 = vshrl.u32 %v272, 7
    %v274 = vsub.s32 0, %v273
    %v275 = vrot.slane %v270, %v274
    %v276 = vlaneseq
    %v277 = vshrl.u32 %v276, 7
    %v278 = vsub.s32 1, %v277
    %v279 = vrot.slane %v270, %v278
    %v314 = vunpack.c.l.b16 %v238
    %v315 = vunpack.c.h.b16 %v238
    %v316 = vunpack.c.l.b16 %v239
    %v317 = vunpack.c.h.b16 %v239
    %v318 = vunpack.c.l.b16 %v240
    %v319 = vunpack.c.h.b16 %v240
    %v320 = vunpack.c.l.b16 %v241
    %v321 = vunpack.c.h.b16 %v241
    %v322 = vunpack.c.l.b16 %v242
    %v323 = vunpack.c.h.b16 %v242
    %v324 = vunpack.c.l.b16 %v243
    %v325 = vunpack.c.h.b16 %v243
    %v326 = vunpack.c.l.b16 %v244
    %v327 = vunpack.c.h.b16 %v244
    %v328 = vunpack.c.l.b16 %v245
    %v329 = vunpack.c.h.b16 %v245
    %v330 = vunpack.c.l.b16 %v246
    %v331 = vunpack.c.h.b16 %v246
    %v332 = vunpack.c.l.b16 %v247
    %v333 = vunpack.c.h.b16 %v247
    %v334 = vunpack.c.l.b16 %v248
    %v335 = vunpack.c.h.b16 %v248
    %v336 = vunpack.c.l.b16 %v249
    %v337 = vunpack.c.h.b16 %v249
    %v338 = vunpack.c.l.b16 %v250
    %v339 = vunpack.c.h.b16 %v250
    %v340 = vunpack.c.l.b16 %v251
    %v341 = vunpack.c.h.b16 %v251
    %v342 = vunpack.c.l.b16 %v252
    %v343 = vunpack.c.h.b16 %v252
    %v344 = vunpack.c.l.b16 %v253
    %v345 = vunpack.c.h.b16 %v253
    %v346 = vunpack.c.l.b16 %v254
    %v347 = vunpack.c.h.b16 %v254
    %v348 = vunpack.c.l.b16 %v255
    %v349 = vunpack.c.h.b16 %v255
    %v350 = vunpack.c.l.b16 %v256
    %v351 = vunpack.c.h.b16 %v256
    %v352 = vunpack.c.l.b16 %v257
    %v353 = vunpack.c.h.b16 %v257
    %v354 = vunpack.c.l.b16 %v258
    %v355 = vunpack.c.h.b16 %v258
    %v356 = vunpack.c.l.b16 %v259
    %v357 = vunpack.c.h.b16 %v259
    %v358 = vunpack.c.l.b16 %v260
    %v359 = vunpack.c.h.b16 %v260
    %v360 = vunpack.c.l.b16 %v261
    %v361 = vunpack.c.h.b16 %v261
    %v362 = vunpack.c.l.b16 %v262
    %v363 = vunpack.c.h.b16 %v262
    %v364 = vunpack.c.l.b16 %v263
    %v365 = vunpack.c.h.b16 %v263
    %v366 = vunpack.c.l.b16 %v264
    %v367 = vunpack.c.h.b16 %v264
    %v368 = vunpack.c.l.b16 %v265
    %v369 = vunpack.c.h.b16 %v265
    %v370 = vunpack.c.l.b16 %v266
    %v371 = vunpack.c.h.b16 %v266
    %v372 = vunpack.c.l.b16 %v267
    %v373 = vunpack.c.h.b16 %v267
    %v374 = vunpack.c.l.b16 %v268
    %v375 = vunpack.c.h.b16 %v268
    %v376 = vunpack.c.l.b16 %v269
    %v377 = vunpack.c.h.b16 %v269
    %v378 = vpack.c.b16 %v316, %v314
    %v379 = vpack.c.b16 %v317, %v315
    %v380 = vpack.c.b16 %v320, %v318
    %v381 = vpack.c.b16 %v321, %v319
    %v382 = vpack.c.b16 %v324, %v322
    %v383 = vpack.c.b16 %v325, %v323
    %v384 = vpack.c.b16 %v328, %v326
    %v385 = vpack.c.b16 %v329, %v327
    %v386 = vpack.c.b16 %v332, %v330
    %v387 = vpack.c.b16 %v333, %v331
    %v388 = vpack.c.b16 %v336, %v334
    %v389 = vpack.c.b16 %v337, %v335
    %v390 = vpack.c.b16 %v340, %v338
    %v391 = vpack.c.b16 %v341, %v339
    %v392 = vpack.c.b16 %v344, %v342
    %v393 = vpack.c.b16 %v345, %v343
    %v394 = vpack.c.b16 %v348, %v346
    %v395 = vpack.c.b16 %v349, %v347
    %v396 = vpack.c.b16 %v352, %v350
    %v397 = vpack.c.b16 %v353, %v351
    %v398 = vpack.c.b16 %v356, %v354
    %v399 = vpack.c.b16 %v357, %v355
    %v400 = vpack.c.b16 %v360, %v358
    %v401 = vpack.c.b16 %v361, %v359
    %v402 = vpack.c.b16 %v364, %v362
    %v403 = vpack.c.b16 %v365, %v363
    %v404 = vpack.c.b16 %v368, %v366
    %v405 = vpack.c.b16 %v369, %v367
    %v406 = vpack.c.b16 %v372, %v370
    %v407 = vpack.c.b16 %v373, %v371
    %v408 = vpack.c.b16 %v376, %v374
    %v409 = vpack.c.b16 %v377, %v375
    %442 = vmatprep.subr.bf16.mxu0 %v393
    %443 = vmatpush1.bf16.msra.mxu0 %v392
    %444 = vmatprep.subr.bf16.mxu0 %v391
    %445 = vmatpush1.bf16.msra.mxu0 %v390
    %446 = vmatprep.subr.bf16.mxu0 %v389
    %447 = vmatpush1.bf16.msra.mxu0 %v388
    %448 = vmatprep.subr.bf16.mxu0 %v387
    %449 = vmatpush1.bf16.msra.mxu0 %v386
    %450 = vmatprep.subr.bf16.mxu0 %v385
    %451 = vmatpush1.bf16.msra.mxu0 %v384
    %452 = vmatprep.subr.bf16.mxu0 %v383
    %453 = vmatpush1.bf16.msra.mxu0 %v382
    %454 = vmatprep.subr.bf16.mxu0 %v381
    %455 = vmatpush1.bf16.msra.mxu0 %v380
    %456 = vmatprep.subr.bf16.mxu0 %v379
    %457 = vmatpush1.bf16.msra.mxu0 %v378
    %458 = vmatprep.subr.bf16.mxu0 %v409
    %459 = vmatpush2.bf16.msra.mxu0 %v408
    %460 = vmatprep.subr.bf16.mxu0 %v407
    %461 = vmatpush2.bf16.msra.mxu0 %v406
    %462 = vmatprep.subr.bf16.mxu0 %v405
    %463 = vmatpush2.bf16.msra.mxu0 %v404
    %464 = vmatprep.subr.bf16.mxu0 %v403
    %465 = vmatpush2.bf16.msra.mxu0 %v402
    %466 = vmatprep.subr.bf16.mxu0 %v401
    %467 = vmatpush2.bf16.msra.mxu0 %v400
    %468 = vmatprep.subr.bf16.mxu0 %v399
    %469 = vmatpush2.bf16.msra.mxu0 %v398
    %470 = vmatprep.subr.bf16.mxu0 %v397
    %471 = vmatpush2.bf16.msra.mxu0 %v396
    %472 = vmatprep.subr.bf16.mxu0 %v395
    %473 = vmatpush2.bf16.msra.mxu0 %v394
    %474 = vmatprep.mubr.bf16.mxu0 %v235
    %475 = vmatmul.mubr.bf16.gmra.mxu0 %v234
    %v476 = vpop.f32.mrf.mxu0
    %v477 = vadd.f32 %v275, %v476
    %v478 = vpop.f32.mrf.mxu0
    %v479 = vadd.f32 %v279, %v478
    %v480 = vpop.f32.mrf.mxu0
    %v481 = vadd.f32 %v275, %v480
    %v482 = vpop.f32.mrf.mxu0
    %v483 = vadd.f32 %v279, %v482
    %484 = vdwg.mxu0
    %v485 = vmax.f32 %v477, 0.0
    %v486 = vmax.f32 %v479, 0.0
    %v487 = vmax.f32 %v481, 0.0
    %v488 = vmax.f32 %v483, 0.0
    %v489 = vpack.c.bf16 %v487, %v485
    %v490 = vpack.c.bf16 %v488, %v486
    %v491 = vld [vmem:[#allocation2 + $0x8] sm:$0xff]
    %v492 = vld [vmem:[#allocation2 + $0x18] sm:$0xff]
    %v493 = vld [vmem:[#allocation2 + $0x28] sm:$0xff]
    %v494 = vld [vmem:[#allocation2 + $0x38] sm:$0xff]
    %v495 = vld [vmem:[#allocation2 + $0x48] sm:$0xff]
    %v496 = vld [vmem:[#allocation2 + $0x58] sm:$0xff]
    %v497 = vld [vmem:[#allocation2 + $0x68] sm:$0xff]
    %v498 = vld [vmem:[#allocation2 + $0x78] sm:$0xff]
    %v499 = vld [vmem:[#allocation2 + $0x88] sm:$0xff]
    %v500 = vld [vmem:[#allocation2 + $0x98] sm:$0xff]
    %v501 = vld [vmem:[#allocation2 + $0xa8] sm:$0xff]
    %v502 = vld [vmem:[#allocation2 + $0xb8] sm:$0xff]
    %v503 = vld [vmem:[#allocation2 + $0xc8] sm:$0xff]
    %v504 = vld [vmem:[#allocation2 + $0xd8] sm:$0xff]
    %v505 = vld [vmem:[#allocation2 + $0xe8] sm:$0xff]
    %v506 = vld [vmem:[#allocation2 + $0xf8] sm:$0xff]
    %v507 = vld [vmem:[#allocation2 + $0x108] sm:$0xff]
    %v508 = vld [vmem:[#allocation2 + $0x118] sm:$0xff]
    %v509 = vld [vmem:[#allocation2 + $0x128] sm:$0xff]
    %v510 = vld [vmem:[#allocation2 + $0x138] sm:$0xff]
    %v511 = vld [vmem:[#allocation2 + $0x148] sm:$0xff]
    %v512 = vld [vmem:[#allocation2 + $0x158] sm:$0xff]
    %v513 = vld [vmem:[#allocation2 + $0x168] sm:$0xff]
    %v514 = vld [vmem:[#allocation2 + $0x178] sm:$0xff]
    %v515 = vld [vmem:[#allocation2 + $0x188] sm:$0xff]
    %v516 = vld [vmem:[#allocation2 + $0x198] sm:$0xff]
    %v517 = vld [vmem:[#allocation2 + $0x1a8] sm:$0xff]
    %v518 = vld [vmem:[#allocation2 + $0x1b8] sm:$0xff]
    %v519 = vld [vmem:[#allocation2 + $0x1c8] sm:$0xff]
    %v520 = vld [vmem:[#allocation2 + $0x1d8] sm:$0xff]
    %v521 = vld [vmem:[#allocation2 + $0x1e8] sm:$0xff]
    %v522 = vld [vmem:[#allocation2 + $0x1f8] sm:$0xff]
    %v523 = vld [vmem:[%s4 + $0x2] sm:$0x3]
    %v525 = vlaneseq
    %v526 = vshrl.u32 %v525, 7
    %v527 = vsub.s32 0, %v526
    %v528 = vrot.slane %v523, %v527
    %v529 = vlaneseq
    %v530 = vshrl.u32 %v529, 7
    %v531 = vsub.s32 1, %v530
    %v532 = vrot.slane %v523, %v531
    %v567 = vunpack.c.l.b16 %v491
    %v568 = vunpack.c.h.b16 %v491
    %v569 = vunpack.c.l.b16 %v492
    %v570 = vunpack.c.h.b16 %v492
    %v571 = vunpack.c.l.b16 %v493
    %v572 = vunpack.c.h.b16 %v493
    %v573 = vunpack.c.l.b16 %v494
    %v574 = vunpack.c.h.b16 %v494
    %v575 = vunpack.c.l.b16 %v495
    %v576 = vunpack.c.h.b16 %v495
    %v577 = vunpack.c.l.b16 %v496
    %v578 = vunpack.c.h.b16 %v496
    %v579 = vunpack.c.l.b16 %v497
    %v580 = vunpack.c.h.b16 %v497
    %v581 = vunpack.c.l.b16 %v498
    %v582 = vunpack.c.h.b16 %v498
    %v583 = vunpack.c.l.b16 %v499
    %v584 = vunpack.c.h.b16 %v499
    %v585 = vunpack.c.l.b16 %v500
    %v586 = vunpack.c.h.b16 %v500
    %v587 = vunpack.c.l.b16 %v501
    %v588 = vunpack.c.h.b16 %v501
    %v589 = vunpack.c.l.b16 %v502
    %v590 = vunpack.c.h.b16 %v502
    %v591 = vunpack.c.l.b16 %v503
    %v592 = vunpack.c.h.b16 %v503
    %v593 = vunpack.c.l.b16 %v504
    %v594 = vunpack.c.h.b16 %v504
    %v595 = vunpack.c.l.b16 %v505
    %v596 = vunpack.c.h.b16 %v505
    %v597 = vunpack.c.l.b16 %v506
    %v598 = vunpack.c.h.b16 %v506
    %v599 = vunpack.c.l.b16 %v507
    %v600 = vunpack.c.h.b16 %v507
    %v601 = vunpack.c.l.b16 %v508
    %v602 = vunpack.c.h.b16 %v508
    %v603 = vunpack.c.l.b16 %v509
    %v604 = vunpack.c.h.b16 %v509
    %v605 = vunpack.c.l.b16 %v510
    %v606 = vunpack.c.h.b16 %v510
    %v607 = vunpack.c.l.b16 %v511
    %v608 = vunpack.c.h.b16 %v511
    %v609 = vunpack.c.l.b16 %v512
    %v610 = vunpack.c.h.b16 %v512
    %v611 = vunpack.c.l.b16 %v513
    %v612 = vunpack.c.h.b16 %v513
    %v613 = vunpack.c.l.b16 %v514
    %v614 = vunpack.c.h.b16 %v514
    %v615 = vunpack.c.l.b16 %v515
    %v616 = vunpack.c.h.b16 %v515
    %v617 = vunpack.c.l.b16 %v516
    %v618 = vunpack.c.h.b16 %v516
    %v619 = vunpack.c.l.b16 %v517
    %v620 = vunpack.c.h.b16 %v517
    %v621 = vunpack.c.l.b16 %v518
    %v622 = vunpack.c.h.b16 %v518
    %v623 = vunpack.c.l.b16 %v519
    %v624 = vunpack.c.h.b16 %v519
    %v625 = vunpack.c.l.b16 %v520
    %v626 = vunpack.c.h.b16 %v520
    %v627 = vunpack.c.l.b16 %v521
    %v628 = vunpack.c.h.b16 %v521
    %v629 = vunpack.c.l.b16 %v522
    %v630 = vunpack.c.h.b16 %v522
    %v631 = vpack.c.b16 %v569, %v567
    %v632 = vpack.c.b16 %v570, %v568
    %v633 = vpack.c.b16 %v573, %v571
    %v634 = vpack.c.b16 %v574, %v572
    %v635 = vpack.c.b16 %v577, %v575
    %v636 = vpack.c.b16 %v578, %v576
    %v637 = vpack.c.b16 %v581, %v579
    %v638 = vpack.c.b16 %v582, %v580
    %v639 = vpack.c.b16 %v585, %v583
    %v640 = vpack.c.b16 %v586, %v584
    %v641 = vpack.c.b16 %v589, %v587
    %v642 = vpack.c.b16 %v590, %v588
    %v643 = vpack.c.b16 %v593, %v591
    %v644 = vpack.c.b16 %v594, %v592
    %v645 = vpack.c.b16 %v597, %v595
    %v646 = vpack.c.b16 %v598, %v596
    %v647 = vpack.c.b16 %v601, %v599
    %v648 = vpack.c.b16 %v602, %v600
    %v649 = vpack.c.b16 %v605, %v603
    %v650 = vpack.c.b16 %v606, %v604
    %v651 = vpack.c.b16 %v609, %v607
    %v652 = vpack.c.b16 %v610, %v608
    %v653 = vpack.c.b16 %v613, %v611
    %v654 = vpack.c.b16 %v614, %v612
    %v655 = vpack.c.b16 %v617, %v615
    %v656 = vpack.c.b16 %v618, %v616
    %v657 = vpack.c.b16 %v621, %v619
    %v658 = vpack.c.b16 %v622, %v620
    %v659 = vpack.c.b16 %v625, %v623
    %v660 = vpack.c.b16 %v626, %v624
    %v661 = vpack.c.b16 %v629, %v627
    %v662 = vpack.c.b16 %v630, %v628
    %695 = vmatprep.subr.bf16.mxu0 %v646
    %696 = vmatpush1.bf16.msra.mxu0 %v645
    %697 = vmatprep.subr.bf16.mxu0 %v644
    %698 = vmatpush1.bf16.msra.mxu0 %v643
    %699 = vmatprep.subr.bf16.mxu0 %v642
    %700 = vmatpush1.bf16.msra.mxu0 %v641
    %701 = vmatprep.subr.bf16.mxu0 %v640
    %702 = vmatpush1.bf16.msra.mxu0 %v639
    %703 = vmatprep.subr.bf16.mxu0 %v638
    %704 = vmatpush1.bf16.msra.mxu0 %v637
    %705 = vmatprep.subr.bf16.mxu0 %v636
    %706 = vmatpush1.bf16.msra.mxu0 %v635
    %707 = vmatprep.subr.bf16.mxu0 %v634
    %708 = vmatpush1.bf16.msra.mxu0 %v633
    %709 = vmatprep.subr.bf16.mxu0 %v632
    %710 = vmatpush1.bf16.msra.mxu0 %v631
    %711 = vmatprep.subr.bf16.mxu0 %v662
    %712 = vmatpush2.bf16.msra.mxu0 %v661
    %713 = vmatprep.subr.bf16.mxu0 %v660
    %714 = vmatpush2.bf16.msra.mxu0 %v659
    %715 = vmatprep.subr.bf16.mxu0 %v658
    %716 = vmatpush2.bf16.msra.mxu0 %v657
    %717 = vmatprep.subr.bf16.mxu0 %v656
    %718 = vmatpush2.bf16.msra.mxu0 %v655
    %719 = vmatprep.subr.bf16.mxu0 %v654
    %720 = vmatpush2.bf16.msra.mxu0 %v653
    %721 = vmatprep.subr.bf16.mxu0 %v652
    %722 = vmatpush2.bf16.msra.mxu0 %v651
    %723 = vmatprep.subr.bf16.mxu0 %v650
    %724 = vmatpush2.bf16.msra.mxu0 %v649
    %725 = vmatprep.subr.bf16.mxu0 %v648
    %726 = vmatpush2.bf16.msra.mxu0 %v647
    %727 = vmatprep.mubr.bf16.mxu0 %v237
    %728 = vmatmul.mubr.bf16.gmra.mxu0 %v236
    %v729 = vpop.f32.mrf.mxu0
    %v730 = vadd.f32 %v528, %v729
    %v731 = vpop.f32.mrf.mxu0
    %v732 = vadd.f32 %v532, %v731
    %v733 = vpop.f32.mrf.mxu0
    %v734 = vadd.f32 %v528, %v733
    %v735 = vpop.f32.mrf.mxu0
    %v736 = vadd.f32 %v532, %v735
    %737 = vdwg.mxu0
    %v738 = vmax.f32 %v730, 0.0
    %v739 = vmax.f32 %v732, 0.0
    %v740 = vmax.f32 %v734, 0.0
    %v741 = vmax.f32 %v736, 0.0
    %v742 = vpack.c.bf16 %v740, %v738
    %v743 = vpack.c.bf16 %v741, %v739
    %v744 = vld [vmem:[%s5] sm:$0xf]
    %v745 = vld [vmem:[%s5 + $0x4] sm:$0xf]
    %v746 = vld [vmem:[%s5 + $0x8] sm:$0xf]
    %v747 = vld [vmem:[%s5 + $0xc] sm:$0xf]
    %v748 = vld [vmem:[%s5 + $0x10] sm:$0xf]
    %v749 = vld [vmem:[%s5 + $0x14] sm:$0xf]
    %v750 = vld [vmem:[%s5 + $0x18] sm:$0xf]
    %v751 = vld [vmem:[%s5 + $0x1c] sm:$0xf]
    %v752 = vld [vmem:[%s5 + $0x20] sm:$0xf]
    %v753 = vld [vmem:[%s5 + $0x24] sm:$0xf]
    %v754 = vld [vmem:[%s5 + $0x28] sm:$0xf]
    %v755 = vld [vmem:[%s5 + $0x2c] sm:$0xf]
    %v756 = vld [vmem:[%s5 + $0x30] sm:$0xf]
    %v757 = vld [vmem:[%s5 + $0x34] sm:$0xf]
    %v758 = vld [vmem:[%s5 + $0x38] sm:$0xf]
    %v759 = vld [vmem:[%s5 + $0x3c] sm:$0xf]
    %v760 = vld [vmem:[%s5 + $0x40] sm:$0xf]
    %v761 = vld [vmem:[%s5 + $0x44] sm:$0xf]
    %v762 = vld [vmem:[%s5 + $0x48] sm:$0xf]
    %v763 = vld [vmem:[%s5 + $0x4c] sm:$0xf]
    %v764 = vld [vmem:[%s5 + $0x50] sm:$0xf]
    %v765 = vld [vmem:[%s5 + $0x54] sm:$0xf]
    %v766 = vld [vmem:[%s5 + $0x58] sm:$0xf]
    %v767 = vld [vmem:[%s5 + $0x5c] sm:$0xf]
    %v768 = vld [vmem:[%s5 + $0x60] sm:$0xf]
    %v769 = vld [vmem:[%s5 + $0x64] sm:$0xf]
    %v770 = vld [vmem:[%s5 + $0x68] sm:$0xf]
    %v771 = vld [vmem:[%s5 + $0x6c] sm:$0xf]
    %v772 = vld [vmem:[%s5 + $0x70] sm:$0xf]
    %v773 = vld [vmem:[%s5 + $0x74] sm:$0xf]
    %v774 = vld [vmem:[%s5 + $0x78] sm:$0xf]
    %v775 = vld [vmem:[%s5 + $0x7c] sm:$0xf]
    %v776 = vld [vmem:[%s5 + $0x80] sm:$0xf]
    %v777 = vld [vmem:[%s5 + $0x84] sm:$0xf]
    %v778 = vld [vmem:[%s5 + $0x88] sm:$0xf]
    %v779 = vld [vmem:[%s5 + $0x8c] sm:$0xf]
    %v780 = vld [vmem:[%s5 + $0x90] sm:$0xf]
    %v781 = vld [vmem:[%s5 + $0x94] sm:$0xf]
    %v782 = vld [vmem:[%s5 + $0x98] sm:$0xf]
    %v783 = vld [vmem:[%s5 + $0x9c] sm:$0xf]
    %v784 = vld [vmem:[%s5 + $0xa0] sm:$0xf]
    %v785 = vld [vmem:[%s5 + $0xa4] sm:$0xf]
    %v786 = vld [vmem:[%s5 + $0xa8] sm:$0xf]
    %v787 = vld [vmem:[%s5 + $0xac] sm:$0xf]
    %v788 = vld [vmem:[%s5 + $0xb0] sm:$0xf]
    %v789 = vld [vmem:[%s5 + $0xb4] sm:$0xf]
    %v790 = vld [vmem:[%s5 + $0xb8] sm:$0xf]
    %v791 = vld [vmem:[%s5 + $0xbc] sm:$0xf]
    %v792 = vld [vmem:[%s5 + $0xc0] sm:$0xf]
    %v793 = vld [vmem:[%s5 + $0xc4] sm:$0xf]
    %v794 = vld [vmem:[%s5 + $0xc8] sm:$0xf]
    %v795 = vld [vmem:[%s5 + $0xcc] sm:$0xf]
    %v796 = vld [vmem:[%s5 + $0xd0] sm:$0xf]
    %v797 = vld [vmem:[%s5 + $0xd4] sm:$0xf]
    %v798 = vld [vmem:[%s5 + $0xd8] sm:$0xf]
    %v799 = vld [vmem:[%s5 + $0xdc] sm:$0xf]
    %v800 = vld [vmem:[%s5 + $0xe0] sm:$0xf]
    %v801 = vld [vmem:[%s5 + $0xe4] sm:$0xf]
    %v802 = vld [vmem:[%s5 + $0xe8] sm:$0xf]
    %v803 = vld [vmem:[%s5 + $0xec] sm:$0xf]
    %v804 = vld [vmem:[%s5 + $0xf0] sm:$0xf]
    %v805 = vld [vmem:[%s5 + $0xf4] sm:$0xf]
    %v806 = vld [vmem:[%s5 + $0xf8] sm:$0xf]
    %v807 = vld [vmem:[%s5 + $0xfc] sm:$0xf]
    %v808 = vld [vmem:[%s6] sm:$0x1]
    %v810 = vlaneseq
    %v811 = vshrl.u32 %v810, 7
    %v812 = vsub.s32 0, %v811
    %v813 = vrot.slane %v808, %v812
    %v879 = vunpack.c.l.b16 %v744
    %v880 = vunpack.c.l.b16 %v745
    %v881 = vunpack.c.l.b16 %v746
    %v882 = vunpack.c.l.b16 %v747
    %v883 = vunpack.c.l.b16 %v748
    %v884 = vunpack.c.l.b16 %v749
    %v885 = vunpack.c.l.b16 %v750
    %v886 = vunpack.c.l.b16 %v751
    %v887 = vunpack.c.l.b16 %v752
    %v888 = vunpack.c.l.b16 %v753
    %v889 = vunpack.c.l.b16 %v754
    %v890 = vunpack.c.l.b16 %v755
    %v891 = vunpack.c.l.b16 %v756
    %v892 = vunpack.c.l.b16 %v757
    %v893 = vunpack.c.l.b16 %v758
    %v894 = vunpack.c.l.b16 %v759
    %v895 = vunpack.c.l.b16 %v760
    %v896 = vunpack.c.l.b16 %v761
    %v897 = vunpack.c.l.b16 %v762
    %v898 = vunpack.c.l.b16 %v763
    %v899 = vunpack.c.l.b16 %v764
    %v900 = vunpack.c.l.b16 %v765
    %v901 = vunpack.c.l.b16 %v766
    %v902 = vunpack.c.l.b16 %v767
    %v903 = vunpack.c.l.b16 %v768
    %v904 = vunpack.c.l.b16 %v769
    %v905 = vunpack.c.l.b16 %v770
    %v906 = vunpack.c.l.b16 %v771
    %v907 = vunpack.c.l.b16 %v772
    %v908 = vunpack.c.l.b16 %v773
    %v909 = vunpack.c.l.b16 %v774
    %v910 = vunpack.c.l.b16 %v775
    %v911 = vunpack.c.l.b16 %v776
    %v912 = vunpack.c.l.b16 %v777
    %v913 = vunpack.c.l.b16 %v778
    %v914 = vunpack.c.l.b16 %v779
    %v915 = vunpack.c.l.b16 %v780
    %v916 = vunpack.c.l.b16 %v781
    %v917 = vunpack.c.l.b16 %v782
    %v918 = vunpack.c.l.b16 %v783
    %v919 = vunpack.c.l.b16 %v784
    %v920 = vunpack.c.l.b16 %v785
    %v921 = vunpack.c.l.b16 %v786
    %v922 = vunpack.c.l.b16 %v787
    %v923 = vunpack.c.l.b16 %v788
    %v924 = vunpack.c.l.b16 %v789
    %v925 = vunpack.c.l.b16 %v790
    %v926 = vunpack.c.l.b16 %v791
    %v927 = vunpack.c.l.b16 %v792
    %v928 = vunpack.c.l.b16 %v793
    %v929 = vunpack.c.l.b16 %v794
    %v930 = vunpack.c.l.b16 %v795
    %v931 = vunpack.c.l.b16 %v796
    %v932 = vunpack.c.l.b16 %v797
    %v933 = vunpack.c.l.b16 %v798
    %v934 = vunpack.c.l.b16 %v799
    %v935 = vunpack.c.l.b16 %v800
    %v936 = vunpack.c.l.b16 %v801
    %v937 = vunpack.c.l.b16 %v802
    %v938 = vunpack.c.l.b16 %v803
    %v939 = vunpack.c.l.b16 %v804
    %v940 = vunpack.c.l.b16 %v805
    %v941 = vunpack.c.l.b16 %v806
    %v942 = vunpack.c.l.b16 %v807
    %v943 = vpack.c.b16 %v880, %v879
    %v944 = vpack.c.b16 %v882, %v881
    %v945 = vpack.c.b16 %v884, %v883
    %v946 = vpack.c.b16 %v886, %v885
    %v947 = vpack.c.b16 %v888, %v887
    %v948 = vpack.c.b16 %v890, %v889
    %v949 = vpack.c.b16 %v892, %v891
    %v950 = vpack.c.b16 %v894, %v893
    %v951 = vpack.c.b16 %v896, %v895
    %v952 = vpack.c.b16 %v898, %v897
    %v953 = vpack.c.b16 %v900, %v899
    %v954 = vpack.c.b16 %v902, %v901
    %v955 = vpack.c.b16 %v904, %v903
    %v956 = vpack.c.b16 %v906, %v905
    %v957 = vpack.c.b16 %v908, %v907
    %v958 = vpack.c.b16 %v910, %v909
    %v959 = vpack.c.b16 %v912, %v911
    %v960 = vpack.c.b16 %v914, %v913
    %v961 = vpack.c.b16 %v916, %v915
    %v962 = vpack.c.b16 %v918, %v917
    %v963 = vpack.c.b16 %v920, %v919
    %v964 = vpack.c.b16 %v922, %v921
    %v965 = vpack.c.b16 %v924, %v923
    %v966 = vpack.c.b16 %v926, %v925
    %v967 = vpack.c.b16 %v928, %v927
    %v968 = vpack.c.b16 %v930, %v929
    %v969 = vpack.c.b16 %v932, %v931
    %v970 = vpack.c.b16 %v934, %v933
    %v971 = vpack.c.b16 %v936, %v935
    %v972 = vpack.c.b16 %v938, %v937
    %v973 = vpack.c.b16 %v940, %v939
    %v974 = vpack.c.b16 %v942, %v941
    %1007 = vmatprep.subr.bf16.mxu0 0
    %1008 = vmatpush1.bf16.msra.mxu0 %v950
    %1009 = vmatprep.subr.bf16.mxu0 0
    %1010 = vmatpush1.bf16.msra.mxu0 %v949
    %1011 = vmatprep.subr.bf16.mxu0 0
    %1012 = vmatpush1.bf16.msra.mxu0 %v948
    %1013 = vmatprep.subr.bf16.mxu0 0
    %1014 = vmatpush1.bf16.msra.mxu0 %v947
    %1015 = vmatprep.subr.bf16.mxu0 0
    %1016 = vmatpush1.bf16.msra.mxu0 %v946
    %1017 = vmatprep.subr.bf16.mxu0 0
    %1018 = vmatpush1.bf16.msra.mxu0 %v945
    %1019 = vmatprep.subr.bf16.mxu0 0
    %1020 = vmatpush1.bf16.msra.mxu0 %v944
    %1021 = vmatprep.subr.bf16.mxu0 0
    %1022 = vmatpush1.bf16.msra.mxu0 %v943
    %1023 = vmatprep.subr.bf16.mxu0 0
    %1024 = vmatpush2.bf16.msra.mxu0 %v958
    %1025 = vmatprep.subr.bf16.mxu0 0
    %1026 = vmatpush2.bf16.msra.mxu0 %v957
    %1027 = vmatprep.subr.bf16.mxu0 0
    %1028 = vmatpush2.bf16.msra.mxu0 %v956
    %1029 = vmatprep.subr.bf16.mxu0 0
    %1030 = vmatpush2.bf16.msra.mxu0 %v955
    %1031 = vmatprep.subr.bf16.mxu0 0
    %1032 = vmatpush2.bf16.msra.mxu0 %v954
    %1033 = vmatprep.subr.bf16.mxu0 0
    %1034 = vmatpush2.bf16.msra.mxu0 %v953
    %1035 = vmatprep.subr.bf16.mxu0 0
    %1036 = vmatpush2.bf16.msra.mxu0 %v952
    %1037 = vmatprep.subr.bf16.mxu0 0
    %1038 = vmatpush2.bf16.msra.mxu0 %v951
    %1039 = vmatprep.mubr.bf16.mxu0 %v490
    %1040 = vmatmul.mubr.bf16.gmra.mxu0 %v489
    %v1041 = vpop.f32.mrf.mxu0
    %v1042 = vadd.f32 %v813, %v1041
    %v1043 = vpop.f32.mrf.mxu0
    %v1044 = vpop.f32.mrf.mxu0
    %v1045 = vadd.f32 %v813, %v1044
    %v1046 = vpop.f32.mrf.mxu0
    %1047 = vdwg.mxu0
    %1048 = vmatprep.subr.bf16.mxu0 0
    %1049 = vmatpush1.bf16.msra.mxu0 %v966
    %1050 = vmatprep.subr.bf16.mxu0 0
    %1051 = vmatpush1.bf16.msra.mxu0 %v965
    %1052 = vmatprep.subr.bf16.mxu0 0
    %1053 = vmatpush1.bf16.msra.mxu0 %v964
    %1054 = vmatprep.subr.bf16.mxu0 0
    %1055 = vmatpush1.bf16.msra.mxu0 %v963
    %1056 = vmatprep.subr.bf16.mxu0 0
    %1057 = vmatpush1.bf16.msra.mxu0 %v962
    %1058 = vmatprep.subr.bf16.mxu0 0
    %1059 = vmatpush1.bf16.msra.mxu0 %v961
    %1060 = vmatprep.subr.bf16.mxu0 0
    %1061 = vmatpush1.bf16.msra.mxu0 %v960
    %1062 = vmatprep.subr.bf16.mxu0 0
    %1063 = vmatpush1.bf16.msra.mxu0 %v959
    %1064 = vmatprep.subr.bf16.mxu0 0
    %1065 = vmatpush2.bf16.msra.mxu0 %v974
    %1066 = vmatprep.subr.bf16.mxu0 0
    %1067 = vmatpush2.bf16.msra.mxu0 %v973
    %1068 = vmatprep.subr.bf16.mxu0 0
    %1069 = vmatpush2.bf16.msra.mxu0 %v972
    %1070 = vmatprep.subr.bf16.mxu0 0
    %1071 = vmatpush2.bf16.msra.mxu0 %v971
    %1072 = vmatprep.subr.bf16.mxu0 0
    %1073 = vmatpush2.bf16.msra.mxu0 %v970
    %1074 = vmatprep.subr.bf16.mxu0 0
    %1075 = vmatpush2.bf16.msra.mxu0 %v969
    %1076 = vmatprep.subr.bf16.mxu0 0
    %1077 = vmatpush2.bf16.msra.mxu0 %v968
    %1078 = vmatprep.subr.bf16.mxu0 0
    %1079 = vmatpush2.bf16.msra.mxu0 %v967
    %1080 = vmatprep.mubr.bf16.mxu0 %v743
    %1081 = vmatmul.mubr.bf16.gmra.mxu0 %v742
    %v1082 = vpop.f32.mrf.mxu0
    %v1083 = vadd.f32 %v1042, %v1082
    %v1084 = vpop.f32.mrf.mxu0
    %v1085 = vpop.f32.mrf.mxu0
    %v1086 = vadd.f32 %v1045, %v1085
    %v1087 = vpop.f32.mrf.mxu0
    %1088 = vdwg.mxu0
    %vm1089 = vcmask 15360
    %1090 = vst.msk [vmem:[#allocation4] sm:$0xff] %vm1089, %v1083
    %1091 = vst.msk [vmem:[#allocation4 + $0x8] sm:$0xff] %vm1089, %v1086
    // Predicated region
    $region34: #{tpu_custom_call.1} parent=1 // pred_check
      _
    $region35: #{tpu_custom_call.1} parent=1 // pred_check_branch
      %1093 = sbr.rel (0) target = $region37
    $region36: #{tpu_custom_call.1} parent=1 // pred_region
      // Predicated region
      $region38: #{tpu_custom_call.1} parent=36 // pred_check
        _
      $region39: #{tpu_custom_call.1} parent=36 // pred_check_branch
        %1095 = sbr.rel (0) target = $region41
      $region40: #{tpu_custom_call.1} parent=36 // pred_region
        // Predicated region
        $region42: #{tpu_custom_call.1} parent=40 // pred_check
          _
        $region43: #{tpu_custom_call.1} parent=40 // pred_check_branch
          %1097 = sbr.rel target = $region45
        $region44: #{tpu_custom_call.1} parent=40 // pred_region
          // Predicated region
          $region57: #{tpu_custom_call.1} parent=44 // pred_check
            _
          $region58: #{tpu_custom_call.1} parent=44 // pred_check_branch
            %1113 = sbr.rel (0) target = $region60
          $region59: #{tpu_custom_call.1} parent=44 // pred_region
            %s1115 = ssub.s32 16, 1
            loop: start=0, step=1, limit=1
            $region61: #{tpu_custom_call.1} parent=59 // loop_pre_header
              _
            $region62: #{tpu_custom_call.1} parent=59 // loop_header
              %s1117 = sphi 0, %s1121
              %p1118 = scmp.ge.s32.totalorder %s1117, 1
              %s1122 = sphi [#allocation4], [#allocation4]
              %s1123 = sphi %s7, %s7
            $region63: #{tpu_custom_call.1} parent=59 // loop_header_branch
              %1120 = sbr.rel (%p1118) target = $region67
            $region64: #{tpu_custom_call.1} parent=59 // loop_body
              %v1124 = vld [vmem:[%s1122] sm:%s1115]
              %1125 = vst [vmem:[%s1123] sm:%s1115] %v1124
            $region65: #{tpu_custom_call.1} parent=59 // loop_footer
              %s1121 = sadd.s32 1, %s1117
            $region66: #{tpu_custom_call.1} parent=59 // loop_footer_branch
              %1116 = sbr.rel target = $region62
            $region67: #{tpu_custom_call.1} parent=59 // loop_exit
              _
          $region60: #{tpu_custom_call.1} parent=44 // pred_fallthru
            _
        $region45: #{tpu_custom_call.1} parent=40 // pred_fallthru
          _
        // Predicated region
        $region46: #{tpu_custom_call.1} parent=40 // pred_check
          _
        $region47: #{tpu_custom_call.1} parent=40 // pred_check_branch
          %1099 = sbr.rel (0) target = $region49
        $region48: #{tpu_custom_call.1} parent=40 // pred_region
          %s1101 = ssub.s32 16, 1
          loop: start=0, step=1, limit=1
          $region50: #{tpu_custom_call.1} parent=48 // loop_pre_header
            _
          $region51: #{tpu_custom_call.1} parent=48 // loop_header
            %s1103 = sphi 0, %s1107
            %p1104 = scmp.ge.s32.totalorder %s1103, 1
            %s1108 = sphi [#allocation4], [#allocation4]
            %s1109 = sphi %s7, %s7
          $region52: #{tpu_custom_call.1} parent=48 // loop_header_branch
            %1106 = sbr.rel (%p1104) target = $region56
          $region53: #{tpu_custom_call.1} parent=48 // loop_body
            %v1110 = vld [vmem:[%s1108] sm:%s1101]
            %1111 = vst [vmem:[%s1109] sm:%s1101] %v1110
          $region54: #{tpu_custom_call.1} parent=48 // loop_footer
            %s1107 = sadd.s32 1, %s1103
          $region55: #{tpu_custom_call.1} parent=48 // loop_footer_branch
            %1102 = sbr.rel target = $region51
          $region56: #{tpu_custom_call.1} parent=48 // loop_exit
            _
        $region49: #{tpu_custom_call.1} parent=40 // pred_fallthru
          _
      $region41: #{tpu_custom_call.1} parent=36 // pred_fallthru
        _
      %1126 = vnop
    $region37: #{tpu_custom_call.1} parent=1 // pred_fallthru
      _
    // Predicated region
    $region68: #{tpu_custom_call.1} parent=1 // pred_check
      _
    $region69: #{tpu_custom_call.1} parent=1 // pred_check_branch
      %1128 = sbr.rel (0) target = $region71
    $region70: #{tpu_custom_call.1} parent=1 // pred_region
      _
    $region71: #{tpu_custom_call.1} parent=1 // pred_fallthru
      _
    %1129 = vsyncpa [#allocation3], 1

</llo_original>
